<compile_context>
chip_gen: v7x
topology: tpu7x:2x2x1
jax: 0.10.0
libtpu: 0.0.40
codegen_flags: <defaults>
</compile_context>

<pallas_src>
import functools

import jax
import jax.numpy as jnp
from jax.experimental import pallas as pl
from jax.experimental.pallas import tpu as pltpu


# -----------------------------------------------------------------------------
# Kernel
# -----------------------------------------------------------------------------
def _vit_stack_kernel(x_ref, gamma_ref, beta_ref, wqkv_ref, wout_ref, bout_ref,
                      o_ref, act_ref, *, b_blk, seq, heads, dim_head,
                      matmul_dtype):
    """One Residual(PreNorm(Attention)) layer; activation carried in VMEM."""
    layer = pl.program_id(1)
    m_tok = b_blk * seq
    inner = heads * dim_head
    d = x_ref.shape[-1]

    # Layer 0: load this batch block into the VMEM activation carry.
    @pl.when(layer == 0)
    def _():
        act_ref[...] = x_ref[...].reshape(m_tok, d).astype(jnp.float32)

    x = act_ref[...]                                    # (M, D) f32 residual

    # ---- LayerNorm (f32, eps=1e-5, elementwise affine) ----
    mean = jnp.mean(x, axis=-1, keepdims=True)
    var = jnp.mean((x - mean) ** 2, axis=-1, keepdims=True)
    xn = (x - mean) * jax.lax.rsqrt(var + 1e-5)
    xn = xn * gamma_ref[0] + beta_ref[0]                # (M, D)

    # ---- Fused QKV projection: one lane-dense bf16 matmul, f32 accum ----
    qkv = jnp.dot(xn.astype(matmul_dtype), wqkv_ref[0],
                  preferred_element_type=jnp.float32)   # (M, 3*inner)

    # ---- Per-head scaled-dot-product attention (scale folded into Q cols) ----
    head_outs = []
    for h in range(heads):
        q_h = qkv[:, h * dim_head:(h + 1) * dim_head]
        k_h = qkv[:, inner + h * dim_head:inner + (h + 1) * dim_head]
        v_h = qkv[:, 2 * inner + h * dim_head:2 * inner + (h + 1) * dim_head]
        q_h = q_h.reshape(b_blk, seq, dim_head).astype(matmul_dtype)
        k_h = k_h.reshape(b_blk, seq, dim_head).astype(matmul_dtype)
        v_h = v_h.reshape(b_blk, seq, dim_head).astype(matmul_dtype)

        dots = jnp.einsum("bie,bje->bij", q_h, k_h,
                          preferred_element_type=jnp.float32)  # (B_blk, N, N)
        dots = dots - jnp.max(dots, axis=-1, keepdims=True)
        p = jnp.exp(dots)
        p = p * pl.reciprocal(jnp.sum(p, axis=-1, keepdims=True), approx=True)

        out_h = jnp.einsum("bij,bjd->bid", p.astype(matmul_dtype), v_h,
                           preferred_element_type=jnp.float32)  # (B_blk, N, dh)
        head_outs.append(out_h)

    # (B_blk, N, inner) with (h, dh) column ordering, matching wout rows.
    out = jnp.concatenate(head_outs, axis=-1).reshape(m_tok, inner)

    # ---- Output projection: head sum happens inside the MXU f32 accumulator ----
    proj = jnp.dot(out.astype(matmul_dtype), wout_ref[0],
                   preferred_element_type=jnp.float32) + bout_ref[0]  # (M, D)

    # ---- Residual; carry activation to the next layer ----
    new_x = proj + x
    act_ref[...] = new_x

    @pl.when(layer == pl.num_programs(1) - 1)
    def _():
        o_ref[...] = new_x.reshape(b_blk, seq, d).astype(o_ref.dtype)


# -----------------------------------------------------------------------------
# Wrapper
# -----------------------------------------------------------------------------
def _pick_batch_block(batch, seq):
    """Largest divisor of `batch` that keeps matmul rows near 128, while
    leaving >= 2 steps along the parallel batch axis when possible (v7x 2 TCs)."""
    target = max(1, 128 // max(seq, 1))
    b_blk = 1
    for cand in range(1, batch + 1):
        if batch % cand == 0 and cand <= target:
            b_blk = cand
    if batch // b_blk < 2 and b_blk > 1:
        for cand in range(b_blk, 0, -1):
            if batch % cand == 0 and batch // cand >= 2:
                b_blk = cand
                break
    return b_blk


def _estimate_vmem_bytes(b_blk, seq, dim, inner, w_itemsize):
    f32 = 4
    m = b_blk * seq
    dbuf = 2  # double buffering of BlockSpec inputs/outputs
    io = dbuf * 2 * (b_blk * seq * dim) * f32                 # x + out blocks
    vecs = dbuf * 3 * dim * f32                               # gamma/beta/bout
    weights = dbuf * (dim * 3 * inner + inner * dim) * w_itemsize
    scratch = m * dim * f32                                   # activation carry
    interm = (m * 3 * inner + b_blk * seq * seq + m * inner + 3 * m * dim) * f32
    return io + vecs + weights + scratch + 2 * interm + (4 << 20)


def _cost_estimate(batch, seq, dim, heads, dim_head, depth, w_itemsize):
    inner = heads * dim_head
    m = batch * seq
    flops = depth * (2 * m * dim * 3 * inner            # QKV
                     + 2 * batch * heads * seq * seq * dim_head   # scores
                     + 2 * batch * heads * seq * seq * dim_head   # attn @ v
                     + 2 * m * inner * dim)              # out projection
    transcendentals = depth * (batch * heads * seq * seq + m)
    bytes_accessed = (depth * ((dim * 3 * inner + inner * dim) * w_itemsize
                               + 3 * dim * 4)
                      + 2 * batch * seq * dim * 4)
    return pl.CostEstimate(flops=int(flops),
                           transcendentals=int(transcendentals),
                           bytes_accessed=int(bytes_accessed))


def transformer_forward(x, prepped, *, heads, dim_head, batch_block=None):
    """x: (B, N, D) float32.  Runs the whole depth-L stack in one pallas_call."""
    B, N, D = x.shape
    gamma, beta, bout = prepped["gamma"], prepped["beta"], prepped["bout"]
    wqkv, wout = prepped["wqkv"], prepped["wout"]
    L = gamma.shape[0]
    inner = heads * dim_head
    assert wqkv.shape == (L, D, 3 * inner) and wout.shape == (L, inner, D)

    b_blk = batch_block if batch_block is not None else _pick_batch_block(B, N)
    assert B % b_blk == 0

    kernel = functools.partial(_vit_stack_kernel, b_blk=b_blk, seq=N,
                               heads=heads, dim_head=dim_head,
                               matmul_dtype=wqkv.dtype)

    vmem_bytes = _estimate_vmem_bytes(b_blk, N, D, inner, wqkv.dtype.itemsize)
    vmem_bytes = int(min(max(vmem_bytes, 32 << 20), 128 << 20))
    vec_spec = pl.BlockSpec((1, 1, D), lambda b, l: (l, 0, 0))

    return pl.pallas_call(
        kernel,
        out_shape=jax.ShapeDtypeStruct((B, N, D), x.dtype),
        grid_spec=pltpu.PrefetchScalarGridSpec(
            num_scalar_prefetch=0,
            grid=(B // b_blk, L),                        # depth innermost
            in_specs=[
                pl.BlockSpec((b_blk, N, D), lambda b, l: (b, 0, 0)),        # x
                vec_spec,                                                   # gamma
                vec_spec,                                                   # beta
                pl.BlockSpec((1, D, 3 * inner), lambda b, l: (l, 0, 0)),    # wqkv (Q scaled)
                pl.BlockSpec((1, inner, D), lambda b, l: (l, 0, 0)),        # wout
                vec_spec,                                                   # b_out
            ],
            out_specs=pl.BlockSpec((b_blk, N, D), lambda b, l: (b, 0, 0)),
            scratch_shapes=[pltpu.VMEM((b_blk * N, D), jnp.float32)],
        ),
        compiler_params=pltpu.CompilerParams(
            dimension_semantics=("parallel", "arbitrary"),
            vmem_limit_bytes=vmem_bytes),
        cost_estimate=_cost_estimate(B, N, D, heads, dim_head, L,
                                     wqkv.dtype.itemsize),
    )(x, gamma, beta, wqkv, wout, bout)


# -----------------------------------------------------------------------------
# Parameters (PyTorch layout) and kernel-friendly repacking
# -----------------------------------------------------------------------------
def init_params(key, depth, dim, heads, dim_head):
    """Per-layer params in the PyTorch nn.Module layout."""
    inner = heads * dim_head
    layers = []
    for _ in range(depth):
        k1, k2, k3, k4, k5, key = jax.random.split(key, 6)
        layers.append(dict(
            gamma=jax.random.normal(k1, (dim,), jnp.float32) * 0.1 + 1.0,
            beta=jax.random.normal(k2, (dim,), jnp.float32) * 0.1,
            # nn.Linear(dim, 3*inner, bias=False).weight: (3*inner, dim)
            w_qkv=jax.random.normal(k3, (3 * inner, dim), jnp.float32) * dim ** -0.5,
            # nn.Linear(inner, dim).weight: (dim, inner); bias: (dim,)
            w_out=jax.random.normal(k4, (dim, inner), jnp.float32) * inner ** -0.5,
            b_out=jax.random.normal(k5, (dim,), jnp.float32) * 0.01,
        ))
    return layers


def prep_params(layer_params, *, heads, dim_head, matmul_dtype=jnp.bfloat16):
    """Repack PyTorch-layout params into stacked, lane-dense, kernel-friendly
    arrays.  Pure re-layout + folding the 1/sqrt(dh) softmax scale into the Q
    columns; semantics-preserving up to bf16 MXU operand rounding."""
    inner = heads * dim_head
    scale = dim_head ** -0.5

    gammas, betas, bouts, wqkvs, wouts = ([] for _ in range(5))
    for p in layer_params:
        wqkv_t = p["w_qkv"].T                            # (D, 3*inner), (h,dh) cols
        wqkv_t = wqkv_t.at[:, :inner].multiply(scale)    # fold softmax scale into Q
        wqkvs.append(wqkv_t)
        wouts.append(p["w_out"].T)                       # (inner, D), (h,dh) rows
        gammas.append(p["gamma"][None])                  # (1, D)
        betas.append(p["beta"][None])
        bouts.append(p["b_out"][None])

    return dict(
        gamma=jnp.stack(gammas),                         # (L, 1, D) f32
        beta=jnp.stack(betas),
        bout=jnp.stack(bouts),
        wqkv=jnp.stack(wqkvs).astype(matmul_dtype),      # (L, D, 3*inner)
        wout=jnp.stack(wouts).astype(matmul_dtype),      # (L, inner, D)
    )


# -----------------------------------------------------------------------------
# Pure-JAX reference (same bf16 MXU-operand rounding as the kernel)
# -----------------------------------------------------------------------------
def reference_forward(x, prepped, *, heads, dim_head):
    gamma, beta, bout = prepped["gamma"], prepped["beta"], prepped["bout"]
    wqkv, wout = prepped["wqkv"], prepped["wout"]
    L = gamma.shape[0]
    inner = heads * dim_head
    mm = wqkv.dtype
    B, N, D = x.shape
    for l in range(L):
        mean = jnp.mean(x, axis=-1, keepdims=True)
        var = jnp.mean((x - mean) ** 2, axis=-1, keepdims=True)
        xn = (x - mean) / jnp.sqrt(var + 1e-5) * gamma[l, 0] + beta[l, 0]
        qkv = jnp.einsum("bnd,de->bne", xn.astype(mm), wqkv[l],
                         preferred_element_type=jnp.float32)     # (B, N, 3*inner)
        q, k, v = jnp.split(qkv, 3, axis=-1)

        def heads_first(t):  # (B, N, inner) -> (B, H, N, dh)
            return t.reshape(B, N, heads, dim_head).transpose(0, 2, 1, 3)

        q, k, v = heads_first(q), heads_first(k), heads_first(v)
        dots = jnp.einsum("bhie,bhje->bhij", q.astype(mm), k.astype(mm),
                          preferred_element_type=jnp.float32)
        attn = jax.nn.softmax(dots, axis=-1)
        out = jnp.einsum("bhij,bhjd->bhid", attn.astype(mm), v.astype(mm),
                         preferred_element_type=jnp.float32)     # (B, H, N, dh)
        out = out.transpose(0, 2, 1, 3).reshape(B, N, inner)
        proj = jnp.einsum("bne,ed->bnd", out.astype(mm), wout[l],
                          preferred_element_type=jnp.float32) + bout[l, 0]
        x = proj + x
    return x


if __name__ == "__main__":
    # Small shapes: batch=2, seq=8, dim(outpatch_els)=32, depth=2, heads=4, dim_head=16
    B, N, D = 2, 8, 32
    depth, heads, dim_head = 2, 4, 16

    key = jax.random.PRNGKey(0)
    kx, kp = jax.random.split(key)
    x = jax.random.normal(kx, (B, N, D), jnp.float32)

    params = init_params(kp, depth, D, heads, dim_head)
    prepped = prep_params(params, heads=heads, dim_head=dim_head)

    out = transformer_forward(x, prepped, heads=heads, dim_head=dim_head)
    out = jax.block_until_ready(out)

    ref = reference_forward(x, prepped, heads=heads, dim_head=dim_head)
    assert out.shape == (B, N, D)
    assert jnp.allclose(out, ref, atol=1e-2, rtol=1e-2), \
        f"max abs err {jnp.max(jnp.abs(out - ref))}"

    print("KERNEL_OK")
</pallas_src>

<mosaic_0001>
module attributes {stable_mosaic.version = 11 : i64} {
  func.func @_vit_stack_kernel(%arg0: i32, %arg1: i32, %arg2: memref<1x8x32xf32, #tpu.memory_space<vmem>>, %arg3: memref<1x1x32xf32, #tpu.memory_space<vmem>>, %arg4: memref<1x1x32xf32, #tpu.memory_space<vmem>>, %arg5: memref<1x32x192xbf16, #tpu.memory_space<vmem>>, %arg6: memref<1x64x32xbf16, #tpu.memory_space<vmem>>, %arg7: memref<1x1x32xf32, #tpu.memory_space<vmem>>, %arg8: memref<1x8x32xf32, #tpu.memory_space<vmem>>, %arg9: memref<8x32xf32, #tpu.memory_space<vmem>>) attributes {dimension_semantics = [#tpu.dimension_semantics<parallel>, #tpu.dimension_semantics<arbitrary>], iteration_bounds = array<i64: 2, 2>, scalar_prefetch = 0 : i64, scratch_operands = 1 : i64, tpu.core_type = #tpu.core_type<tc>, window_params = [{transform_indices = @transform_0, window_bounds = array<i64: 1, 8, 32>}, {transform_indices = @transform_1, window_bounds = array<i64: 1, 1, 32>}, {transform_indices = @transform_2, window_bounds = array<i64: 1, 1, 32>}, {transform_indices = @transform_3, window_bounds = array<i64: 1, 32, 192>}, {transform_indices = @transform_4, window_bounds = array<i64: 1, 64, 32>}, {transform_indices = @transform_5, window_bounds = array<i64: 1, 1, 32>}, {transform_indices = @transform_6, window_bounds = array<i64: 1, 8, 32>}]} {
    %c0_i32 = arith.constant 0 : i32
    %0 = arith.cmpi eq, %arg1, %c0_i32 : i32
    %1 = arith.extui %0 : i1 to i32
    %c0_i32_0 = arith.constant 0 : i32
    %2 = arith.cmpi ne, %1, %c0_i32_0 : i32
    scf.if %2 {
      %c0_42 = arith.constant 0 : index
      %c0_43 = arith.constant 0 : index
      %c0_44 = arith.constant 0 : index
      %137 = vector.load %arg2[%c0_42, %c0_43, %c0_44] : memref<1x8x32xf32, #tpu.memory_space<vmem>>, vector<1x8x32xf32>
      %138 = vector.shape_cast %137 : vector<1x8x32xf32> to vector<8x32xf32>
      %c0_45 = arith.constant 0 : index
      %c0_46 = arith.constant 0 : index
      %139 = vector.load %arg9[%c0_45, %c0_46] : memref<8x32xf32, #tpu.memory_space<vmem>>, vector<8x32xf32>
      tpu.vector_store %arg9[%c0_45, %c0_46], %138 {strides = array<i32>} : memref<8x32xf32, #tpu.memory_space<vmem>>, vector<8x32xf32>,
    } else {
    }
    %c0 = arith.constant 0 : index
    %c0_1 = arith.constant 0 : index
    %3 = vector.load %arg9[%c0, %c0_1] : memref<8x32xf32, #tpu.memory_space<vmem>>, vector<8x32xf32>
    %cst = arith.constant dense<0.000000e+00> : vector<8xf32>
    %4 = vector.multi_reduction <add>, %3, %cst [1] : vector<8x32xf32> to vector<8xf32>
    %5 = vector.shape_cast %4 : vector<8xf32> to vector<8x1xf32>
    %cst_2 = arith.constant 3.200000e+01 : f32
    %6 = vector.broadcast %cst_2 : f32 to vector<8x1xf32>
    %7 = arith.divf %5, %6 : vector<8x1xf32>
    %8 = vector.broadcast %7 : vector<8x1xf32> to vector<8x32xf32>
    %9 = arith.subf %3, %8 : vector<8x32xf32>
    %10 = arith.mulf %9, %9 : vector<8x32xf32>
    %cst_3 = arith.constant dense<0.000000e+00> : vector<8xf32>
    %11 = vector.multi_reduction <add>, %10, %cst_3 [1] : vector<8x32xf32> to vector<8xf32>
    %12 = vector.shape_cast %11 : vector<8xf32> to vector<8x1xf32>
    %cst_4 = arith.constant 3.200000e+01 : f32
    %13 = vector.broadcast %cst_4 : f32 to vector<8x1xf32>
    %14 = arith.divf %12, %13 : vector<8x1xf32>
    %15 = vector.broadcast %7 : vector<8x1xf32> to vector<8x32xf32>
    %16 = arith.subf %3, %15 : vector<8x32xf32>
    %cst_5 = arith.constant 9.99999974E-6 : f32
    %17 = vector.broadcast %cst_5 : f32 to vector<8x1xf32>
    %18 = arith.addf %14, %17 : vector<8x1xf32>
    %19 = math.rsqrt %18 : vector<8x1xf32>
    %20 = vector.broadcast %19 : vector<8x1xf32> to vector<8x32xf32>
    %21 = arith.mulf %16, %20 : vector<8x32xf32>
    %c0_6 = arith.constant 0 : index
    %c0_7 = arith.constant 0 : index
    %c0_8 = arith.constant 0 : index
    %22 = vector.load %arg3[%c0_6, %c0_7, %c0_8] : memref<1x1x32xf32, #tpu.memory_space<vmem>>, vector<1x1x32xf32>
    %23 = vector.shape_cast %22 : vector<1x1x32xf32> to vector<1x32xf32>
    %24 = vector.broadcast %23 : vector<1x32xf32> to vector<8x32xf32>
    %25 = arith.mulf %21, %24 : vector<8x32xf32>
    %c0_9 = arith.constant 0 : index
    %c0_10 = arith.constant 0 : index
    %c0_11 = arith.constant 0 : index
    %26 = vector.load %arg4[%c0_9, %c0_10, %c0_11] : memref<1x1x32xf32, #tpu.memory_space<vmem>>, vector<1x1x32xf32>
    %27 = vector.shape_cast %26 : vector<1x1x32xf32> to vector<1x32xf32>
    %28 = vector.broadcast %27 : vector<1x32xf32> to vector<8x32xf32>
    %29 = arith.addf %25, %28 : vector<8x32xf32>
    %30 = arith.truncf %29 : vector<8x32xf32> to vector<8x32xbf16>
    %c0_12 = arith.constant 0 : index
    %c0_13 = arith.constant 0 : index
    %c0_14 = arith.constant 0 : index
    %31 = vector.load %arg5[%c0_12, %c0_13, %c0_14] : memref<1x32x192xbf16, #tpu.memory_space<vmem>>, vector<1x32x192xbf16>
    %32 = vector.shape_cast %31 : vector<1x32x192xbf16> to vector<32x192xbf16>
    %cst_15 = arith.constant dense<0.000000e+00> : vector<8x192xf32>
    %33 = tpu.matmul %30, %32, %cst_15 {dimension_numbers = #tpu.dot_dimension_numbers<[1], [0], [0], [1], [0, 0, 1, 1], [], []>} : vector<8x32xbf16>, vector<32x192xbf16>, vector<8x192xf32> -> vector<8x192xf32>
    %34 = vector.extract_strided_slice %33 {offsets = [0, 0], sizes = [8, 16], strides = [1, 1]} : vector<8x192xf32> to vector<8x16xf32>
    %35 = vector.extract_strided_slice %33 {offsets = [0, 64], sizes = [8, 16], strides = [1, 1]} : vector<8x192xf32> to vector<8x16xf32>
    %36 = vector.extract_strided_slice %33 {offsets = [0, 128], sizes = [8, 16], strides = [1, 1]} : vector<8x192xf32> to vector<8x16xf32>
    %37 = vector.shape_cast %34 : vector<8x16xf32> to vector<1x8x16xf32>
    %38 = arith.truncf %37 : vector<1x8x16xf32> to vector<1x8x16xbf16>
    %39 = vector.shape_cast %35 : vector<8x16xf32> to vector<1x8x16xf32>
    %40 = arith.truncf %39 : vector<1x8x16xf32> to vector<1x8x16xbf16>
    %41 = vector.shape_cast %36 : vector<8x16xf32> to vector<1x8x16xf32>
    %42 = arith.truncf %41 : vector<1x8x16xf32> to vector<1x8x16xbf16>
    "tpu.trace_start"() <{level = 10 : i32, message = "bie,bje->bij"}> : () -> ()
    %cst_16 = arith.constant dense<0.000000e+00> : vector<1x8x8xf32>
    %43 = tpu.matmul %38, %40, %cst_16 {dimension_numbers = #tpu.dot_dimension_numbers<[2], [2], [1], [1], [0, 0, 0, 1, 1, 1], [0], [0]>} : vector<1x8x16xbf16>, vector<1x8x16xbf16>, vector<1x8x8xf32> -> vector<1x8x8xf32>
    "tpu.trace_stop"() : () -> ()
    %cst_17 = arith.constant dense<0xFF800000> : vector<1x8xf32>
    %44 = vector.multi_reduction <maximumf>, %43, %cst_17 [2] : vector<1x8x8xf32> to vector<1x8xf32>
    %45 = vector.shape_cast %44 : vector<1x8xf32> to vector<1x8x1xf32>
    %46 = vector.broadcast %45 : vector<1x8x1xf32> to vector<1x8x8xf32>
    %47 = arith.subf %43, %46 : vector<1x8x8xf32>
    %48 = math.exp %47 : vector<1x8x8xf32>
    %cst_18 = arith.constant dense<0.000000e+00> : vector<1x8xf32>
    %49 = vector.multi_reduction <add>, %48, %cst_18 [2] : vector<1x8x8xf32> to vector<1x8xf32>
    %50 = vector.shape_cast %49 : vector<1x8xf32> to vector<1x8x1xf32>
    %51 = tpu.reciprocal %50 {approx = true} : vector<1x8x1xf32> -> vector<1x8x1xf32>
    %52 = vector.broadcast %51 : vector<1x8x1xf32> to vector<1x8x8xf32>
    %53 = arith.mulf %48, %52 : vector<1x8x8xf32>
    %54 = arith.truncf %53 : vector<1x8x8xf32> to vector<1x8x8xbf16>
    "tpu.trace_start"() <{level = 10 : i32, message = "bij,bjd->bid"}> : () -> ()
    %cst_19 = arith.constant dense<0.000000e+00> : vector<1x8x16xf32>
    %55 = tpu.matmul %54, %42, %cst_19 {dimension_numbers = #tpu.dot_dimension_numbers<[2], [1], [1], [2], [0, 0, 0, 1, 1, 2], [0], [0]>} : vector<1x8x8xbf16>, vector<1x8x16xbf16>, vector<1x8x16xf32> -> vector<1x8x16xf32>
    "tpu.trace_stop"() : () -> ()
    %56 = vector.extract_strided_slice %33 {offsets = [0, 16], sizes = [8, 16], strides = [1, 1]} : vector<8x192xf32> to vector<8x16xf32>
    %57 = vector.extract_strided_slice %33 {offsets = [0, 80], sizes = [8, 16], strides = [1, 1]} : vector<8x192xf32> to vector<8x16xf32>
    %58 = vector.extract_strided_slice %33 {offsets = [0, 144], sizes = [8, 16], strides = [1, 1]} : vector<8x192xf32> to vector<8x16xf32>
    %59 = vector.shape_cast %56 : vector<8x16xf32> to vector<1x8x16xf32>
    %60 = arith.truncf %59 : vector<1x8x16xf32> to vector<1x8x16xbf16>
    %61 = vector.shape_cast %57 : vector<8x16xf32> to vector<1x8x16xf32>
    %62 = arith.truncf %61 : vector<1x8x16xf32> to vector<1x8x16xbf16>
    %63 = vector.shape_cast %58 : vector<8x16xf32> to vector<1x8x16xf32>
    %64 = arith.truncf %63 : vector<1x8x16xf32> to vector<1x8x16xbf16>
    "tpu.trace_start"() <{level = 10 : i32, message = "bie,bje->bij"}> : () -> ()
    %cst_20 = arith.constant dense<0.000000e+00> : vector<1x8x8xf32>
    %65 = tpu.matmul %60, %62, %cst_20 {dimension_numbers = #tpu.dot_dimension_numbers<[2], [2], [1], [1], [0, 0, 0, 1, 1, 1], [0], [0]>} : vector<1x8x16xbf16>, vector<1x8x16xbf16>, vector<1x8x8xf32> -> vector<1x8x8xf32>
    "tpu.trace_stop"() : () -> ()
    %cst_21 = arith.constant dense<0xFF800000> : vector<1x8xf32>
    %66 = vector.multi_reduction <maximumf>, %65, %cst_21 [2] : vector<1x8x8xf32> to vector<1x8xf32>
    %67 = vector.shape_cast %66 : vector<1x8xf32> to vector<1x8x1xf32>
    %68 = vector.broadcast %67 : vector<1x8x1xf32> to vector<1x8x8xf32>
    %69 = arith.subf %65, %68 : vector<1x8x8xf32>
    %70 = math.exp %69 : vector<1x8x8xf32>
    %cst_22 = arith.constant dense<0.000000e+00> : vector<1x8xf32>
    %71 = vector.multi_reduction <add>, %70, %cst_22 [2] : vector<1x8x8xf32> to vector<1x8xf32>
    %72 = vector.shape_cast %71 : vector<1x8xf32> to vector<1x8x1xf32>
    %73 = tpu.reciprocal %72 {approx = true} : vector<1x8x1xf32> -> vector<1x8x1xf32>
    %74 = vector.broadcast %73 : vector<1x8x1xf32> to vector<1x8x8xf32>
    %75 = arith.mulf %70, %74 : vector<1x8x8xf32>
    %76 = arith.truncf %75 : vector<1x8x8xf32> to vector<1x8x8xbf16>
    "tpu.trace_start"() <{level = 10 : i32, message = "bij,bjd->bid"}> : () -> ()
    %cst_23 = arith.constant dense<0.000000e+00> : vector<1x8x16xf32>
    %77 = tpu.matmul %76, %64, %cst_23 {dimension_numbers = #tpu.dot_dimension_numbers<[2], [1], [1], [2], [0, 0, 0, 1, 1, 2], [0], [0]>} : vector<1x8x8xbf16>, vector<1x8x16xbf16>, vector<1x8x16xf32> -> vector<1x8x16xf32>
    "tpu.trace_stop"() : () -> ()
    %78 = vector.extract_strided_slice %33 {offsets = [0, 32], sizes = [8, 16], strides = [1, 1]} : vector<8x192xf32> to vector<8x16xf32>
    %79 = vector.extract_strided_slice %33 {offsets = [0, 96], sizes = [8, 16], strides = [1, 1]} : vector<8x192xf32> to vector<8x16xf32>
    %80 = vector.extract_strided_slice %33 {offsets = [0, 160], sizes = [8, 16], strides = [1, 1]} : vector<8x192xf32> to vector<8x16xf32>
    %81 = vector.shape_cast %78 : vector<8x16xf32> to vector<1x8x16xf32>
    %82 = arith.truncf %81 : vector<1x8x16xf32> to vector<1x8x16xbf16>
    %83 = vector.shape_cast %79 : vector<8x16xf32> to vector<1x8x16xf32>
    %84 = arith.truncf %83 : vector<1x8x16xf32> to vector<1x8x16xbf16>
    %85 = vector.shape_cast %80 : vector<8x16xf32> to vector<1x8x16xf32>
    %86 = arith.truncf %85 : vector<1x8x16xf32> to vector<1x8x16xbf16>
    "tpu.trace_start"() <{level = 10 : i32, message = "bie,bje->bij"}> : () -> ()
    %cst_24 = arith.constant dense<0.000000e+00> : vector<1x8x8xf32>
    %87 = tpu.matmul %82, %84, %cst_24 {dimension_numbers = #tpu.dot_dimension_numbers<[2], [2], [1], [1], [0, 0, 0, 1, 1, 1], [0], [0]>} : vector<1x8x16xbf16>, vector<1x8x16xbf16>, vector<1x8x8xf32> -> vector<1x8x8xf32>
    "tpu.trace_stop"() : () -> ()
    %cst_25 = arith.constant dense<0xFF800000> : vector<1x8xf32>
    %88 = vector.multi_reduction <maximumf>, %87, %cst_25 [2] : vector<1x8x8xf32> to vector<1x8xf32>
    %89 = vector.shape_cast %88 : vector<1x8xf32> to vector<1x8x1xf32>
    %90 = vector.broadcast %89 : vector<1x8x1xf32> to vector<1x8x8xf32>
    %91 = arith.subf %87, %90 : vector<1x8x8xf32>
    %92 = math.exp %91 : vector<1x8x8xf32>
    %cst_26 = arith.constant dense<0.000000e+00> : vector<1x8xf32>
    %93 = vector.multi_reduction <add>, %92, %cst_26 [2] : vector<1x8x8xf32> to vector<1x8xf32>
    %94 = vector.shape_cast %93 : vector<1x8xf32> to vector<1x8x1xf32>
    %95 = tpu.reciprocal %94 {approx = true} : vector<1x8x1xf32> -> vector<1x8x1xf32>
    %96 = vector.broadcast %95 : vector<1x8x1xf32> to vector<1x8x8xf32>
    %97 = arith.mulf %92, %96 : vector<1x8x8xf32>
    %98 = arith.truncf %97 : vector<1x8x8xf32> to vector<1x8x8xbf16>
    "tpu.trace_start"() <{level = 10 : i32, message = "bij,bjd->bid"}> : () -> ()
    %cst_27 = arith.constant dense<0.000000e+00> : vector<1x8x16xf32>
    %99 = tpu.matmul %98, %86, %cst_27 {dimension_numbers = #tpu.dot_dimension_numbers<[2], [1], [1], [2], [0, 0, 0, 1, 1, 2], [0], [0]>} : vector<1x8x8xbf16>, vector<1x8x16xbf16>, vector<1x8x16xf32> -> vector<1x8x16xf32>
    "tpu.trace_stop"() : () -> ()
    %100 = vector.extract_strided_slice %33 {offsets = [0, 48], sizes = [8, 16], strides = [1, 1]} : vector<8x192xf32> to vector<8x16xf32>
    %101 = vector.extract_strided_slice %33 {offsets = [0, 112], sizes = [8, 16], strides = [1, 1]} : vector<8x192xf32> to vector<8x16xf32>
    %102 = vector.extract_strided_slice %33 {offsets = [0, 176], sizes = [8, 16], strides = [1, 1]} : vector<8x192xf32> to vector<8x16xf32>
    %103 = vector.shape_cast %100 : vector<8x16xf32> to vector<1x8x16xf32>
    %104 = arith.truncf %103 : vector<1x8x16xf32> to vector<1x8x16xbf16>
    %105 = vector.shape_cast %101 : vector<8x16xf32> to vector<1x8x16xf32>
    %106 = arith.truncf %105 : vector<1x8x16xf32> to vector<1x8x16xbf16>
    %107 = vector.shape_cast %102 : vector<8x16xf32> to vector<1x8x16xf32>
    %108 = arith.truncf %107 : vector<1x8x16xf32> to vector<1x8x16xbf16>
    "tpu.trace_start"() <{level = 10 : i32, message = "bie,bje->bij"}> : () -> ()
    %cst_28 = arith.constant dense<0.000000e+00> : vector<1x8x8xf32>
    %109 = tpu.matmul %104, %106, %cst_28 {dimension_numbers = #tpu.dot_dimension_numbers<[2], [2], [1], [1], [0, 0, 0, 1, 1, 1], [0], [0]>} : vector<1x8x16xbf16>, vector<1x8x16xbf16>, vector<1x8x8xf32> -> vector<1x8x8xf32>
    "tpu.trace_stop"() : () -> ()
    %cst_29 = arith.constant dense<0xFF800000> : vector<1x8xf32>
    %110 = vector.multi_reduction <maximumf>, %109, %cst_29 [2] : vector<1x8x8xf32> to vector<1x8xf32>
    %111 = vector.shape_cast %110 : vector<1x8xf32> to vector<1x8x1xf32>
    %112 = vector.broadcast %111 : vector<1x8x1xf32> to vector<1x8x8xf32>
    %113 = arith.subf %109, %112 : vector<1x8x8xf32>
    %114 = math.exp %113 : vector<1x8x8xf32>
    %cst_30 = arith.constant dense<0.000000e+00> : vector<1x8xf32>
    %115 = vector.multi_reduction <add>, %114, %cst_30 [2] : vector<1x8x8xf32> to vector<1x8xf32>
    %116 = vector.shape_cast %115 : vector<1x8xf32> to vector<1x8x1xf32>
    %117 = tpu.reciprocal %116 {approx = true} : vector<1x8x1xf32> -> vector<1x8x1xf32>
    %118 = vector.broadcast %117 : vector<1x8x1xf32> to vector<1x8x8xf32>
    %119 = arith.mulf %114, %118 : vector<1x8x8xf32>
    %120 = arith.truncf %119 : vector<1x8x8xf32> to vector<1x8x8xbf16>
    "tpu.trace_start"() <{level = 10 : i32, message = "bij,bjd->bid"}> : () -> ()
    %cst_31 = arith.constant dense<0.000000e+00> : vector<1x8x16xf32>
    %121 = tpu.matmul %120, %108, %cst_31 {dimension_numbers = #tpu.dot_dimension_numbers<[2], [1], [1], [2], [0, 0, 0, 1, 1, 2], [0], [0]>} : vector<1x8x8xbf16>, vector<1x8x16xbf16>, vector<1x8x16xf32> -> vector<1x8x16xf32>
    "tpu.trace_stop"() : () -> ()
    %122 = tpu.concatenate %55, %77, %99, %121 in 2 : vector<1x8x16xf32>, vector<1x8x16xf32>, vector<1x8x16xf32>, vector<1x8x16xf32> -> vector<1x8x64xf32>
    %123 = vector.shape_cast %122 : vector<1x8x64xf32> to vector<8x64xf32>
    %124 = arith.truncf %123 : vector<8x64xf32> to vector<8x64xbf16>
    %c0_32 = arith.constant 0 : index
    %c0_33 = arith.constant 0 : index
    %c0_34 = arith.constant 0 : index
    %125 = vector.load %arg6[%c0_32, %c0_33, %c0_34] : memref<1x64x32xbf16, #tpu.memory_space<vmem>>, vector<1x64x32xbf16>
    %126 = vector.shape_cast %125 : vector<1x64x32xbf16> to vector<64x32xbf16>
    %cst_35 = arith.constant dense<0.000000e+00> : vector<8x32xf32>
    %127 = tpu.matmul %124, %126, %cst_35 {dimension_numbers = #tpu.dot_dimension_numbers<[1], [0], [0], [1], [0, 0, 1, 1], [], []>} : vector<8x64xbf16>, vector<64x32xbf16>, vector<8x32xf32> -> vector<8x32xf32>
    %c0_36 = arith.constant 0 : index
    %c0_37 = arith.constant 0 : index
    %c0_38 = arith.constant 0 : index
    %128 = vector.load %arg7[%c0_36, %c0_37, %c0_38] : memref<1x1x32xf32, #tpu.memory_space<vmem>>, vector<1x1x32xf32>
    %129 = vector.shape_cast %128 : vector<1x1x32xf32> to vector<1x32xf32>
    %130 = vector.broadcast %129 : vector<1x32xf32> to vector<8x32xf32>
    %131 = arith.addf %127, %130 : vector<8x32xf32>
    %132 = arith.addf %131, %3 : vector<8x32xf32>
    %c0_39 = arith.constant 0 : index
    %c0_40 = arith.constant 0 : index
    %133 = vector.load %arg9[%c0_39, %c0_40] : memref<8x32xf32, #tpu.memory_space<vmem>>, vector<8x32xf32>
    tpu.vector_store %arg9[%c0_39, %c0_40], %132 {strides = array<i32>} : memref<8x32xf32, #tpu.memory_space<vmem>>, vector<8x32xf32>,
    %c1_i32 = arith.constant 1 : i32
    %134 = arith.cmpi eq, %arg1, %c1_i32 : i32
    %135 = arith.extui %134 : i1 to i32
    %c0_i32_41 = arith.constant 0 : i32
    %136 = arith.cmpi ne, %135, %c0_i32_41 : i32
    scf.if %136 {
      %137 = vector.shape_cast %132 : vector<8x32xf32> to vector<1x8x32xf32>
      %c0_42 = arith.constant 0 : index
      %c0_43 = arith.constant 0 : index
      %c0_44 = arith.constant 0 : index
      %138 = vector.load %arg8[%c0_42, %c0_43, %c0_44] : memref<1x8x32xf32, #tpu.memory_space<vmem>>, vector<1x8x32xf32>
      tpu.vector_store %arg8[%c0_42, %c0_43, %c0_44], %137 {strides = array<i32>} : memref<1x8x32xf32, #tpu.memory_space<vmem>>, vector<1x8x32xf32>,
    } else {
    }
    return
  }
  func.func @transform_0(%arg0: i32, %arg1: i32) -> (i32, i32, i32) {
    %c0_i32 = arith.constant 0 : i32
    %c0_i32_0 = arith.constant 0 : i32
    %c0_i32_1 = arith.constant 0 : i32
    return %arg0, %c0_i32, %c0_i32_0 : i32, i32, i32
  }
  func.func @transform_1(%arg0: i32, %arg1: i32) -> (i32, i32, i32) {
    %c0_i32 = arith.constant 0 : i32
    %c0_i32_0 = arith.constant 0 : i32
    %c0_i32_1 = arith.constant 0 : i32
    return %arg1, %c0_i32, %c0_i32_0 : i32, i32, i32
  }
  func.func @transform_2(%arg0: i32, %arg1: i32) -> (i32, i32, i32) {
    %c0_i32 = arith.constant 0 : i32
    %c0_i32_0 = arith.constant 0 : i32
    %c0_i32_1 = arith.constant 0 : i32
    return %arg1, %c0_i32, %c0_i32_0 : i32, i32, i32
  }
  func.func @transform_3(%arg0: i32, %arg1: i32) -> (i32, i32, i32) {
    %c0_i32 = arith.constant 0 : i32
    %c0_i32_0 = arith.constant 0 : i32
    %c0_i32_1 = arith.constant 0 : i32
    return %arg1, %c0_i32, %c0_i32_0 : i32, i32, i32
  }
  func.func @transform_4(%arg0: i32, %arg1: i32) -> (i32, i32, i32) {
    %c0_i32 = arith.constant 0 : i32
    %c0_i32_0 = arith.constant 0 : i32
    %c0_i32_1 = arith.constant 0 : i32
    return %arg1, %c0_i32, %c0_i32_0 : i32, i32, i32
  }
  func.func @transform_5(%arg0: i32, %arg1: i32) -> (i32, i32, i32) {
    %c0_i32 = arith.constant 0 : i32
    %c0_i32_0 = arith.constant 0 : i32
    %c0_i32_1 = arith.constant 0 : i32
    return %arg1, %c0_i32, %c0_i32_0 : i32, i32, i32
  }
  func.func @transform_6(%arg0: i32, %arg1: i32) -> (i32, i32, i32) {
    %c0_i32 = arith.constant 0 : i32
    %c0_i32_0 = arith.constant 0 : i32
    %c0_i32_1 = arith.constant 0 : i32
    return %arg0, %c0_i32, %c0_i32_0 : i32, i32, i32
  }
}

</mosaic_0001>

<llo_original>
// kernel: tpu_custom_call.1
$region0: #{tpu_custom_call.1}
  #allocation0 [shape = 'u32[]', space=smem, size = 0x4, offset = 0x4, fixed_abs, tag = 'smem constant byte address 0x4 - core index']
  #allocation1 [shape = 'u32[144,128]{1,0:T(1,128)}', space=vmem, size = 0x12000, scoped, tag = 'internal scratch']
  #allocation2 [shape = 'f32[8,32]{1,0:T(8,128)}', space=vmem, size = 0x1000, scoped, tag = 'scratch operand']
  %s0 = inlined_call_operand.vmem [shape: f32[2,8,32], index: 0, kind: input, shape index: {}]
  %s1 = inlined_call_operand.vmem [shape: f32[2,1,32], index: 1, kind: input, shape index: {}]
  %s2 = inlined_call_operand.vmem [shape: f32[2,1,32], index: 2, kind: input, shape index: {}]
  %s3 = inlined_call_operand.vmem [shape: bf16[2,32,192], index: 3, kind: input, shape index: {}]
  %s4 = inlined_call_operand.vmem [shape: bf16[2,64,32], index: 4, kind: input, shape index: {}]
  %s5 = inlined_call_operand.vmem [shape: f32[2,1,32], index: 5, kind: input, shape index: {}]
  %s6 = inlined_call_operand.hbm [shape: f32[2,8,32], index: 6, kind: output, shape index: {}]
  %s7 = sld [smem:[#allocation0]]
  $region65: #{tpu_custom_call.1} parent=0
    _
  %s9 = ssub.s32 1, %s7
  %s10 = scalar_select 0, %s9, %s7
  $region1: #{tpu_custom_call.1} parent=0
    #allocation3 [shape = 'u8[8192]{0}', space=vmem, size = 0x2000, scoped, tag = 'output window, operand 0']
    #allocation4 [shape = 's32[2]{0}', space=sflag, size = 0x8, scoped, tag = 'scoped memory for tpu_custom_call.1']
    %11 = vsyncpa [#allocation4], 0
    %s12 = scalar_lea.sflag [#allocation4], 1
    %13 = vsyncpa %s12, 0
    loop: start=0, step=1, limit=6
    $region2: #{tpu_custom_call.1} parent=1 // loop_pre_header
      _
    $region3: #{tpu_custom_call.1} parent=1 // loop_header
      %s15 = sphi 0, %s19
      %p16 = scmp.ge.s32.totalorder %s15, 6
      %s22 = sphi 0, %s34
      %s23 = sphi 0, %s30
      %s24 = sphi 0, %s22
      %s25 = sphi 0, %s23
      %s26 = sphi 0, %s24
      %s27 = sphi 0, %s25
      %s37 = sphi 0, %s39
      %s40 = sphi 0, %s37
      %s41 = sphi 0, %s40
      %s57 = sphi 0, %s41
      %s63 = sphi 0, %s65
      %s66 = sphi 0, %s63
      %s67 = sphi 0, %s66
      %s83 = sphi 0, %s67
      %s89 = sphi 0, %s91
      %s92 = sphi 0, %s89
      %s93 = sphi 0, %s92
      %s109 = sphi 0, %s93
      %s115 = sphi 0, %s117
      %s118 = sphi 0, %s115
      %s119 = sphi 0, %s118
      %s135 = sphi 0, %s119
      %s141 = sphi 0, %s143
      %s144 = sphi 0, %s141
      %s145 = sphi 0, %s144
      %s161 = sphi 0, %s145
      %s167 = sphi 0, %s169
      %s170 = sphi 0, %s167
      %s171 = sphi 0, %s170
      %s187 = sphi 0, %s171
      %s193 = sphi 0, %s195
      %s196 = sphi 0, %s193
      %s197 = sphi 0, %s196
      %s213 = sphi 0, %s197
    $region4: #{tpu_custom_call.1} parent=1 // loop_header_branch
      %18 = sbr.rel (%p16) target = $region8
    $region5: #{tpu_custom_call.1} parent=1 // loop_body
      %s20 = ssub.s32 %s15, 1
      %s21 = ssub.s32 %s15, 2
      %s28 = sadd.s32 1, %s23
      %p29 = scmp.ge.s32.totalorder %s28, 2
      %s30 = scalar_select %p29, 0, %s28
      %s31 = sadd.s32 1, %s22
      %s32 = scalar_select %p29, %s31, %s22
      %p33 = scmp.ge.s32.totalorder %s32, 2
      %s34 = scalar_select %p33, 0, %s32
      %s35 = ssub.s32 %s22, %s34
      %p36 = scmp.eq.s32.totalorder %s35, 0
      %s38 = sadd.s32 %s37, 1
      %s39 = scalar_select %p36, %s37, %s38
      %p42 = pneg %p36
      %p43 = scmp.eq.s32.totalorder %s15, 3
      %p44 = por %p42, %p43
      %p45 = scmp.ne.s32.totalorder %s37, %s40
      %p46 = scmp.eq.s32.totalorder %s15, 0
      %p47 = por %p45, %p46
      %p48 = scmp.ne.s32.totalorder %s37, %s40
      %p49 = scmp.eq.s32.totalorder %s20, 3
      %p50 = por %p48, %p49
      %p51 = scmp.ne.s32.totalorder %s40, %s41
      %p52 = scmp.eq.s32.totalorder %s20, 0
      %p53 = por %p51, %p52
      %p54 = scmp.ne.s32.totalorder %s40, %s41
      %p55 = scmp.eq.s32.totalorder %s21, 3
      %p56 = por %p54, %p55
      %p58 = scmp.ne.s32.totalorder %s41, %s57
      %p59 = scmp.eq.s32.totalorder %s21, 0
      %p60 = por %p58, %p59
      %s61 = ssub.s32 %s23, %s30
      %p62 = scmp.eq.s32.totalorder %s61, 0
      %s64 = sadd.s32 %s63, 1
      %s65 = scalar_select %p62, %s63, %s64
      %p68 = pneg %p62
      %p69 = scmp.eq.s32.totalorder %s15, 3
      %p70 = por %p68, %p69
      %p71 = scmp.ne.s32.totalorder %s63, %s66
      %p72 = scmp.eq.s32.totalorder %s15, 0
      %p73 = por %p71, %p72
      %p74 = scmp.ne.s32.totalorder %s63, %s66
      %p75 = scmp.eq.s32.totalorder %s20, 3
      %p76 = por %p74, %p75
      %p77 = scmp.ne.s32.totalorder %s66, %s67
      %p78 = scmp.eq.s32.totalorder %s20, 0
      %p79 = por %p77, %p78
      %p80 = scmp.ne.s32.totalorder %s66, %s67
      %p81 = scmp.eq.s32.totalorder %s21, 3
      %p82 = por %p80, %p81
      %p84 = scmp.ne.s32.totalorder %s67, %s83
      %p85 = scmp.eq.s32.totalorder %s21, 0
      %p86 = por %p84, %p85
      %s87 = ssub.s32 %s23, %s30
      %p88 = scmp.eq.s32.totalorder %s87, 0
      %s90 = sadd.s32 %s89, 1
      %s91 = scalar_select %p88, %s89, %s90
      %p94 = pneg %p88
      %p95 = scmp.eq.s32.totalorder %s15, 3
      %p96 = por %p94, %p95
      %p97 = scmp.ne.s32.totalorder %s89, %s92
      %p98 = scmp.eq.s32.totalorder %s15, 0
      %p99 = por %p97, %p98
      %p100 = scmp.ne.s32.totalorder %s89, %s92
      %p101 = scmp.eq.s32.totalorder %s20, 3
      %p102 = por %p100, %p101
      %p103 = scmp.ne.s32.totalorder %s92, %s93
      %p104 = scmp.eq.s32.totalorder %s20, 0
      %p105 = por %p103, %p104
      %p106 = scmp.ne.s32.totalorder %s92, %s93
      %p107 = scmp.eq.s32.totalorder %s21, 3
      %p108 = por %p106, %p107
      %p110 = scmp.ne.s32.totalorder %s93, %s109
      %p111 = scmp.eq.s32.totalorder %s21, 0
      %p112 = por %p110, %p111
      %s113 = ssub.s32 %s23, %s30
      %p114 = scmp.eq.s32.totalorder %s113, 0
      %s116 = sadd.s32 %s115, 1
      %s117 = scalar_select %p114, %s115, %s116
      %p120 = pneg %p114
      %p121 = scmp.eq.s32.totalorder %s15, 3
      %p122 = por %p120, %p121
      %p123 = scmp.ne.s32.totalorder %s115, %s118
      %p124 = scmp.eq.s32.totalorder %s15, 0
      %p125 = por %p123, %p124
      %p126 = scmp.ne.s32.totalorder %s115, %s118
      %p127 = scmp.eq.s32.totalorder %s20, 3
      %p128 = por %p126, %p127
      %p129 = scmp.ne.s32.totalorder %s118, %s119
      %p130 = scmp.eq.s32.totalorder %s20, 0
      %p131 = por %p129, %p130
      %p132 = scmp.ne.s32.totalorder %s118, %s119
      %p133 = scmp.eq.s32.totalorder %s21, 3
      %p134 = por %p132, %p133
      %p136 = scmp.ne.s32.totalorder %s119, %s135
      %p137 = scmp.eq.s32.totalorder %s21, 0
      %p138 = por %p136, %p137
      %s139 = ssub.s32 %s23, %s30
      %p140 = scmp.eq.s32.totalorder %s139, 0
      %s142 = sadd.s32 %s141, 1
      %s143 = scalar_select %p140, %s141, %s142
      %p146 = pneg %p140
      %p147 = scmp.eq.s32.totalorder %s15, 3
      %p148 = por %p146, %p147
      %p149 = scmp.ne.s32.totalorder %s141, %s144
      %p150 = scmp.eq.s32.totalorder %s15, 0
      %p151 = por %p149, %p150
      %p152 = scmp.ne.s32.totalorder %s141, %s144
      %p153 = scmp.eq.s32.totalorder %s20, 3
      %p154 = por %p152, %p153
      %p155 = scmp.ne.s32.totalorder %s144, %s145
      %p156 = scmp.eq.s32.totalorder %s20, 0
      %p157 = por %p155, %p156
      %p158 = scmp.ne.s32.totalorder %s144, %s145
      %p159 = scmp.eq.s32.totalorder %s21, 3
      %p160 = por %p158, %p159
      %p162 = scmp.ne.s32.totalorder %s145, %s161
      %p163 = scmp.eq.s32.totalorder %s21, 0
      %p164 = por %p162, %p163
      %s165 = ssub.s32 %s23, %s30
      %p166 = scmp.eq.s32.totalorder %s165, 0
      %s168 = sadd.s32 %s167, 1
      %s169 = scalar_select %p166, %s167, %s168
      %p172 = pneg %p166
      %p173 = scmp.eq.s32.totalorder %s15, 3
      %p174 = por %p172, %p173
      %p175 = scmp.ne.s32.totalorder %s167, %s170
      %p176 = scmp.eq.s32.totalorder %s15, 0
      %p177 = por %p175, %p176
      %p178 = scmp.ne.s32.totalorder %s167, %s170
      %p179 = scmp.eq.s32.totalorder %s20, 3
      %p180 = por %p178, %p179
      %p181 = scmp.ne.s32.totalorder %s170, %s171
      %p182 = scmp.eq.s32.totalorder %s20, 0
      %p183 = por %p181, %p182
      %p184 = scmp.ne.s32.totalorder %s170, %s171
      %p185 = scmp.eq.s32.totalorder %s21, 3
      %p186 = por %p184, %p185
      %p188 = scmp.ne.s32.totalorder %s171, %s187
      %p189 = scmp.eq.s32.totalorder %s21, 0
      %p190 = por %p188, %p189
      %s191 = ssub.s32 %s22, %s34
      %p192 = scmp.eq.s32.totalorder %s191, 0
      %s194 = sadd.s32 %s193, 1
      %s195 = scalar_select %p192, %s193, %s194
      %p198 = pneg %p192
      %p199 = scmp.eq.s32.totalorder %s15, 3
      %p200 = por %p198, %p199
      %p201 = scmp.ne.s32.totalorder %s193, %s196
      %p202 = scmp.eq.s32.totalorder %s15, 0
      %p203 = por %p201, %p202
      %p204 = scmp.ne.s32.totalorder %s193, %s196
      %p205 = scmp.eq.s32.totalorder %s20, 3
      %p206 = por %p204, %p205
      %p207 = scmp.ne.s32.totalorder %s196, %s197
      %p208 = scmp.eq.s32.totalorder %s20, 0
      %p209 = por %p207, %p208
      %p210 = scmp.ne.s32.totalorder %s196, %s197
      %p211 = scmp.eq.s32.totalorder %s21, 3
      %p212 = por %p210, %p211
      %p214 = scmp.ne.s32.totalorder %s197, %s213
      %p215 = scmp.eq.s32.totalorder %s21, 0
      %p216 = por %p214, %p215
      %p217 = scmp.le.s32.totalorder 1, %s15
      %p218 = scmp.lt.s32.totalorder %s15, 5
      %p219 = pnand %p217, %p218
      %p220 = pneg %p219
      // Predicated region
      $region9: #{tpu_custom_call.1} parent=5 // pred_check
        _
      $region10: #{tpu_custom_call.1} parent=5 // pred_check_branch
        %222 = sbr.rel (%p219) target = $region12
      $region11: #{tpu_custom_call.1} parent=5 // pred_region
        %s223 = ssub.s32 %s15, 1
      $region12: #{tpu_custom_call.1} parent=5 // pred_fallthru
        _
      %p224 = scmp.lt.s32.totalorder %s15, 4
      // Predicated region
      $region13: #{tpu_custom_call.1} parent=5 // pred_check
        %p225 = pneg %p224
      $region14: #{tpu_custom_call.1} parent=5 // pred_check_branch
        %227 = sbr.rel (%p225) target = $region16
      $region15: #{tpu_custom_call.1} parent=5 // pred_region
        // Predicated region
        $region17: #{tpu_custom_call.1} parent=15 // pred_check
          %p228 = pneg %p47
        $region18: #{tpu_custom_call.1} parent=15 // pred_check_branch
          %230 = sbr.rel (%p228) target = $region20
        $region19: #{tpu_custom_call.1} parent=15 // pred_region
          %p231 = scmp.lt.s32.totalorder %s22, 1
          %s232 = scalar_select %p231, %s22, 1
          %s233 = smul.addr %s232, 8
          %s234 = scalar_lea.vmem %s0, %s233
        $region20: #{tpu_custom_call.1} parent=15 // pred_fallthru
          _
        // Predicated region
        $region21: #{tpu_custom_call.1} parent=15 // pred_check
          %p235 = pneg %p73
        $region22: #{tpu_custom_call.1} parent=15 // pred_check_branch
          %237 = sbr.rel (%p235) target = $region24
        $region23: #{tpu_custom_call.1} parent=15 // pred_region
          %p238 = scmp.lt.s32.totalorder %s23, 1
          %s239 = scalar_select %p238, %s23, 1
          %s240 = scalar_lea.vmem %s1, %s239
        $region24: #{tpu_custom_call.1} parent=15 // pred_fallthru
          _
        // Predicated region
        $region25: #{tpu_custom_call.1} parent=15 // pred_check
          %p241 = pneg %p99
        $region26: #{tpu_custom_call.1} parent=15 // pred_check_branch
          %243 = sbr.rel (%p241) target = $region28
        $region27: #{tpu_custom_call.1} parent=15 // pred_region
          %p244 = scmp.lt.s32.totalorder %s23, 1
          %s245 = scalar_select %p244, %s23, 1
          %s246 = scalar_lea.vmem %s2, %s245
        $region28: #{tpu_custom_call.1} parent=15 // pred_fallthru
          _
        // Predicated region
        $region29: #{tpu_custom_call.1} parent=15 // pred_check
          %p247 = pneg %p125
        $region30: #{tpu_custom_call.1} parent=15 // pred_check_branch
          %249 = sbr.rel (%p247) target = $region32
        $region31: #{tpu_custom_call.1} parent=15 // pred_region
          %p250 = scmp.lt.s32.totalorder %s23, 1
          %s251 = scalar_select %p250, %s23, 1
          %s252 = smul.addr %s251, 8
          %s253 = smul.addr %s252, 4
          %s254 = scalar_lea.vmem %s3, %s253
        $region32: #{tpu_custom_call.1} parent=15 // pred_fallthru
          _
        // Predicated region
        $region33: #{tpu_custom_call.1} parent=15 // pred_check
          %p255 = pneg %p151
        $region34: #{tpu_custom_call.1} parent=15 // pred_check_branch
          %257 = sbr.rel (%p255) target = $region36
        $region35: #{tpu_custom_call.1} parent=15 // pred_region
          %p258 = scmp.lt.s32.totalorder %s23, 1
          %s259 = scalar_select %p258, %s23, 1
          %s260 = smul.addr %s259, 8
          %s261 = smul.addr %s260, 4
          %s262 = scalar_lea.vmem %s4, %s261
        $region36: #{tpu_custom_call.1} parent=15 // pred_fallthru
          _
        // Predicated region
        $region37: #{tpu_custom_call.1} parent=15 // pred_check
          %p263 = pneg %p177
        $region38: #{tpu_custom_call.1} parent=15 // pred_check_branch
          %265 = sbr.rel (%p263) target = $region40
        $region39: #{tpu_custom_call.1} parent=15 // pred_region
          %p266 = scmp.lt.s32.totalorder %s23, 1
          %s267 = scalar_select %p266, %s23, 1
          %s268 = scalar_lea.vmem %s5, %s267
        $region40: #{tpu_custom_call.1} parent=15 // pred_fallthru
          _
      $region16: #{tpu_custom_call.1} parent=5 // pred_fallthru
        _
      %p269 = scmp.le.s32.totalorder 1, %s15
      %p270 = scmp.lt.s32.totalorder %s15, 5
      %p271 = pnand %p269, %p270
      %p272 = pneg %p271
      // Predicated region
      $region41: #{tpu_custom_call.1} parent=5 // pred_check
        _
      $region42: #{tpu_custom_call.1} parent=5 // pred_check_branch
        %274 = sbr.rel (%p271) target = $region44
      $region43: #{tpu_custom_call.1} parent=5 // pred_region
        %s275 = ssub.s32 %s15, 1
        %p276 = scmp.lt.s32.totalorder %s24, 1
        %s277 = scalar_select %p276, %s24, 1
        %s278 = smul.addr %s277, 8
        %s279 = scalar_lea.vmem %s0, %s278
        %p280 = pneg %p53
        %p281 = pneg %p50
        %p282 = scmp.lt.s32.totalorder %s25, 1
        %s283 = scalar_select %p282, %s25, 1
        %s284 = scalar_lea.vmem %s1, %s283
        %p285 = pneg %p79
        %p286 = pneg %p76
        %p287 = scmp.lt.s32.totalorder %s25, 1
        %s288 = scalar_select %p287, %s25, 1
        %s289 = scalar_lea.vmem %s2, %s288
        %p290 = pneg %p105
        %p291 = pneg %p102
        %p292 = scmp.lt.s32.totalorder %s25, 1
        %s293 = scalar_select %p292, %s25, 1
        %s294 = smul.addr %s293, 8
        %s295 = smul.addr %s294, 4
        %s296 = scalar_lea.vmem %s3, %s295
        %p297 = pneg %p131
        %p298 = pneg %p128
        %p299 = scmp.lt.s32.totalorder %s25, 1
        %s300 = scalar_select %p299, %s25, 1
        %s301 = smul.addr %s300, 8
        %s302 = smul.addr %s301, 4
        %s303 = scalar_lea.vmem %s4, %s302
        %p304 = pneg %p157
        %p305 = pneg %p154
        %p306 = scmp.lt.s32.totalorder %s25, 1
        %s307 = scalar_select %p306, %s25, 1
        %s308 = scalar_lea.vmem %s5, %s307
        %p309 = pneg %p183
        %p310 = pneg %p180
        %p311 = pneg %p209
        %p312 = pneg %p206
        %s313 = sand.u32 %s196, 1
        %s314 = scalar_lea.sflag [#allocation4], %s313
        %s315 = sand.u32 %s196, 1
        %s316 = smul.addr %s315, 8
        %s317 = scalar_lea.vmem [#allocation3], %s316
        %p318 = scmp.lt.s32.totalorder %s24, 1
        %s319 = scalar_select %p318, %s24, 1
        %s320 = smul.addr %s319, 8
        %s321 = scalar_lea.vmem %s0, %s320
        %p322 = scmp.lt.s32.totalorder %s25, 1
        %s323 = scalar_select %p322, %s25, 1
        %s324 = scalar_lea.vmem %s1, %s323
        %p325 = scmp.lt.s32.totalorder %s25, 1
        %s326 = scalar_select %p325, %s25, 1
        %s327 = scalar_lea.vmem %s2, %s326
        %p328 = scmp.lt.s32.totalorder %s25, 1
        %s329 = scalar_select %p328, %s25, 1
        %s330 = smul.addr %s329, 8
        %s331 = smul.addr %s330, 4
        %s332 = scalar_lea.vmem %s3, %s331
        %p333 = scmp.lt.s32.totalorder %s25, 1
        %s334 = scalar_select %p333, %s25, 1
        %s335 = smul.addr %s334, 8
        %s336 = smul.addr %s335, 4
        %s337 = scalar_lea.vmem %s4, %s336
        %p338 = scmp.lt.s32.totalorder %s25, 1
        %s339 = scalar_select %p338, %s25, 1
        %s340 = scalar_lea.vmem %s5, %s339
        %p342 = scmp.eq.s32.totalorder %s25, 0
        // Predicated region
        $region45: #{tpu_custom_call.1} parent=43 // pred_check
          %p343 = pneg %p342
        $region46: #{tpu_custom_call.1} parent=43 // pred_check_branch
          %345 = sbr.rel (%p343) target = $region48
        $region47: #{tpu_custom_call.1} parent=43 // pred_region
          %v346 = vld [vmem:[%s321] sm:$0xff]
          %vm347 = vcmask 261120
          %348 = vst.msk [vmem:[#allocation2] sm:$0xff] %vm347, %v346
        $region48: #{tpu_custom_call.1} parent=43 // pred_fallthru
          _
        %v349 = vld [vmem:[#allocation2] sm:$0xff]
        %vm350 = vcmask 261120
        %v351 = vsel %vm350, %v349, 0.0
        %352 = vadd.xlane.f32.xlu0 %v351
        %v353 = vpop.xlane.xlu0 %352
        %v354 = vrcp.pop 32.0
        %v355 = vmul.f32 %v353, %v354
        %v356 = vsub.f32 %v349, %v355
        %v357 = vmul.f32 %v356, %v356
        %v358 = vsel %vm350, %v357, 0.0
        %359 = vadd.xlane.f32.xlu0 %v358
        %v360 = vpop.xlane.xlu0 %359
        %v361 = vmul.f32 %v360, %v354
        %v362 = vadd.f32 %v361, 1e-05
        %v363 = vrsqrt.pop %v362
        %v364 = vmul.f32 %v356, %v363
        %v365 = vld [vmem:[%s324] sm:$0x1]
        %v367 = vlaneseq
        %v368 = vshrl.u32 %v367, 7
        %v369 = vsub.s32 0, %v368
        %v370 = vrot.slane %v365, %v369
        %v372 = vmul.f32 %v364, %v370
        %v373 = vld [vmem:[%s327] sm:$0x1]
        %v375 = vlaneseq
        %v376 = vshrl.u32 %v375, 7
        %v377 = vsub.s32 0, %v376
        %v378 = vrot.slane %v373, %v377
        %v380 = vadd.f32 %v372, %v378
        %v381 = vpack.c.bf16 %v380, %v380
        %v382 = vld [vmem:[%s332] sm:$0xff]
        %v383 = vld [vmem:[%s332 + $0x8] sm:$0xff]
        %v384 = vld [vmem:[%s332 + $0x10] sm:$0xff]
        %v385 = vld [vmem:[%s332 + $0x18] sm:$0xff]
        %v390 = vunpack.c.l.b16 %v382
        %v391 = vunpack.c.h.b16 %v382
        %v392 = vunpack.c.l.b16 %v383
        %v393 = vunpack.c.h.b16 %v383
        %v394 = vunpack.c.l.b16 %v384
        %v395 = vunpack.c.h.b16 %v384
        %v396 = vunpack.c.l.b16 %v385
        %v397 = vunpack.c.h.b16 %v385
        %v398 = vpack.c.b16 %v392, %v390
        %v399 = vpack.c.b16 %v393, %v391
        %v400 = vpack.c.b16 %v396, %v394
        %v401 = vpack.c.b16 %v397, %v395
        %v407 = vsel %vm350, %v381, 0
        %409 = vmatprep.subr.bf16.mxu0 %v399
        %410 = vmatpush1.bf16.msra.mxu0 %v398
        %411 = vmatprep.subr.bf16.mxu0 %v401
        %412 = vmatpush1.bf16.msra.mxu0 %v400
        %413 = vmatprep.subr.bf16.mxu0 0
        %414 = vmatpush1.bf16.msra.mxu0 0
        %415 = vmatprep.subr.bf16.mxu0 0
        %416 = vmatpush1.bf16.msra.mxu0 0
        %417 = vmatprep.subr.bf16.mxu0 0
        %418 = vmatpush1.bf16.msra.mxu0 0
        %419 = vmatprep.subr.bf16.mxu0 0
        %420 = vmatpush1.bf16.msra.mxu0 0
        %421 = vmatprep.subr.bf16.mxu0 0
        %422 = vmatpush1.bf16.msra.mxu0 0
        %423 = vmatprep.subr.bf16.mxu0 0
        %424 = vmatpush1.bf16.msra.mxu0 0
        %425 = vmatprep.subr.bf16.mxu0 0
        %426 = vmatpush1.bf16.msra.mxu0 0
        %427 = vmatprep.subr.bf16.mxu0 0
        %428 = vmatpush1.bf16.msra.mxu0 0
        %429 = vmatprep.subr.bf16.mxu0 0
        %430 = vmatpush1.bf16.msra.mxu0 0
        %431 = vmatprep.subr.bf16.mxu0 0
        %432 = vmatpush1.bf16.msra.mxu0 0
        %433 = vmatprep.subr.bf16.mxu0 0
        %434 = vmatpush1.bf16.msra.mxu0 0
        %435 = vmatprep.subr.bf16.mxu0 0
        %436 = vmatpush1.bf16.msra.mxu0 0
        %437 = vmatprep.subr.bf16.mxu0 0
        %438 = vmatpush1.bf16.msra.mxu0 0
        %439 = vmatprep.subr.bf16.mxu0 0
        %440 = vmatpush1.bf16.msra.mxu0 0
        %441 = vmatprep.mubr.bf16.mxu0 0
        %442 = vmatmul.mubr.bf16.gmra.mrb[0].mxu0 %v407
        %v443 = vpop.f32.mrb[0].mxu0
        %v444 = vadd.f32 0.0, %v443
        %v445 = vpop.f32.mrb[0].mxu0
        %v446 = vadd.f32 0.0, %v445
        %v447 = vpop.f32.mrb[0].mxu0
        %v448 = vpop.f32.mrb[0].mxu0
        %449 = vdwg.mxu0
        %v450 = vpack.c.bf16 %v444, %v444
        %v451 = vpack.c.bf16 %v446, %v446
        %453 = vrot.lane.b32.xlu0 %v450, 64
        %v454 = vpop.permute.xlu0 %453
        %vm455 = vcmask 130048
        %v457 = vsel %vm455, %v450, 0
        %v460 = vsel %vm455, %v454, 0
        %462 = vmatprep.subr.bf16.mxu0 0
        %463 = vmatpush1.bf16.xpose.msra.mxu0 %v460
        %464 = vmatprep.subr.bf16.mxu0 0
        %465 = vmatpush1.bf16.xpose.msra.mxu0 0
        %466 = vmatprep.subr.bf16.mxu0 0
        %467 = vmatpush1.bf16.xpose.msra.mxu0 0
        %468 = vmatprep.subr.bf16.mxu0 0
        %469 = vmatpush1.bf16.xpose.msra.mxu0 0
        %470 = vmatprep.subr.bf16.mxu0 0
        %471 = vmatpush1.bf16.xpose.msra.mxu0 0
        %472 = vmatprep.subr.bf16.mxu0 0
        %473 = vmatpush1.bf16.xpose.msra.mxu0 0
        %474 = vmatprep.subr.bf16.mxu0 0
        %475 = vmatpush1.bf16.xpose.msra.mxu0 0
        %476 = vmatprep.subr.bf16.mxu0 0
        %477 = vmatpush1.bf16.xpose.msra.mxu0 0
        %478 = vmatprep.subr.bf16.mxu0 0
        %479 = vmatpush1.bf16.xpose.msra.mxu0 0
        %480 = vmatprep.subr.bf16.mxu0 0
        %481 = vmatpush1.bf16.xpose.msra.mxu0 0
        %482 = vmatprep.subr.bf16.mxu0 0
        %483 = vmatpush1.bf16.xpose.msra.mxu0 0
        %484 = vmatprep.subr.bf16.mxu0 0
        %485 = vmatpush1.bf16.xpose.msra.mxu0 0
        %486 = vmatprep.subr.bf16.mxu0 0
        %487 = vmatpush1.bf16.xpose.msra.mxu0 0
        %488 = vmatprep.subr.bf16.mxu0 0
        %489 = vmatpush1.bf16.xpose.msra.mxu0 0
        %490 = vmatprep.subr.bf16.mxu0 0
        %491 = vmatpush1.bf16.xpose.msra.mxu0 0
        %492 = vmatprep.subr.bf16.mxu0 0
        %493 = vmatpush1.bf16.xpose.msra.mxu0 0
        %494 = vmatprep.mubr.bf16.mxu0 0
        %495 = vmatmul.mubr.bf16.gmra.mrb[0].mxu0 %v457
        %v496 = vpop.f32.mrb[0].mxu0
        %v497 = vadd.f32 0.0, %v496
        %v498 = vpop.f32.mrb[0].mxu0
        %v499 = vpop.f32.mrb[0].mxu0
        %v500 = vpop.f32.mrb[0].mxu0
        %501 = vdwg.mxu0
        %vm502 = vcmask 64512
        %v503 = vsel %vm502, %v497, -inf
        %504 = vmax.xlane.f32.xlu0 %v503
        %v505 = vpop.xlane.xlu0 %504
        %v506 = vsub.f32 %v497, %v505
        %v507 = vmul.f32 %v506, 1.442695
        %v508 = vpow.pop %v507
        %v509 = vsel %vm502, %v508, 0.0
        %510 = vadd.xlane.f32.xlu0 %v509
        %v511 = vpop.xlane.xlu0 %510
        %v512 = vrcp.pop %v511
        %v513 = vmul.f32 %v508, %v512
        %v514 = vpack.c.bf16 %v513, %v513
        %v516 = vsel %vm502, %v514, 0
        %vm518 = vcmask 1043456
        %v520 = vsel %vm518, %v451, 0
        %522 = vmatprep.subr.bf16.mxu0 0
        %523 = vmatpush1.bf16.msra.mxu0 %v520
        %524 = vmatprep.subr.bf16.mxu0 0
        %525 = vmatpush1.bf16.msra.mxu0 0
        %526 = vmatprep.subr.bf16.mxu0 0
        %527 = vmatpush1.bf16.msra.mxu0 0
        %528 = vmatprep.subr.bf16.mxu0 0
        %529 = vmatpush1.bf16.msra.mxu0 0
        %530 = vmatprep.subr.bf16.mxu0 0
        %531 = vmatpush1.bf16.msra.mxu0 0
        %532 = vmatprep.subr.bf16.mxu0 0
        %533 = vmatpush1.bf16.msra.mxu0 0
        %534 = vmatprep.subr.bf16.mxu0 0
        %535 = vmatpush1.bf16.msra.mxu0 0
        %536 = vmatprep.subr.bf16.mxu0 0
        %537 = vmatpush1.bf16.msra.mxu0 0
        %538 = vmatprep.subr.bf16.mxu0 0
        %539 = vmatpush1.bf16.msra.mxu0 0
        %540 = vmatprep.subr.bf16.mxu0 0
        %541 = vmatpush1.bf16.msra.mxu0 0
        %542 = vmatprep.subr.bf16.mxu0 0
        %543 = vmatpush1.bf16.msra.mxu0 0
        %544 = vmatprep.subr.bf16.mxu0 0
        %545 = vmatpush1.bf16.msra.mxu0 0
        %546 = vmatprep.subr.bf16.mxu0 0
        %547 = vmatpush1.bf16.msra.mxu0 0
        %548 = vmatprep.subr.bf16.mxu0 0
        %549 = vmatpush1.bf16.msra.mxu0 0
        %550 = vmatprep.subr.bf16.mxu0 0
        %551 = vmatpush1.bf16.msra.mxu0 0
        %552 = vmatprep.subr.bf16.mxu0 0
        %553 = vmatpush1.bf16.msra.mxu0 0
        %554 = vmatprep.mubr.bf16.mxu0 0
        %555 = vmatmul.mubr.bf16.gmra.mrb[0].mxu0 %v516
        %v556 = vpop.f32.mrb[0].mxu0
        %v557 = vadd.f32 0.0, %v556
        %v558 = vpop.f32.mrb[0].mxu0
        %v559 = vpop.f32.mrb[0].mxu0
        %v560 = vpop.f32.mrb[0].mxu0
        %561 = vdwg.mxu0
        %562 = vrot.lane.b32.xlu0 %v450, 112
        %v563 = vpop.permute.xlu0 %562
        %564 = vrot.lane.b32.xlu0 %v450, 48
        %v565 = vpop.permute.xlu0 %564
        %v567 = vsel %vm455, %v563, 0
        %v570 = vsel %vm455, %v565, 0
        %572 = vmatprep.subr.bf16.mxu0 0
        %573 = vmatpush1.bf16.xpose.msra.mxu0 %v570
        %574 = vmatprep.subr.bf16.mxu0 0
        %575 = vmatpush1.bf16.xpose.msra.mxu0 0
        %576 = vmatprep.subr.bf16.mxu0 0
        %577 = vmatpush1.bf16.xpose.msra.mxu0 0
        %578 = vmatprep.subr.bf16.mxu0 0
        %579 = vmatpush1.bf16.xpose.msra.mxu0 0
        %580 = vmatprep.subr.bf16.mxu0 0
        %581 = vmatpush1.bf16.xpose.msra.mxu0 0
        %582 = vmatprep.subr.bf16.mxu0 0
        %583 = vmatpush1.bf16.xpose.msra.mxu0 0
        %584 = vmatprep.subr.bf16.mxu0 0
        %585 = vmatpush1.bf16.xpose.msra.mxu0 0
        %586 = vmatprep.subr.bf16.mxu0 0
        %587 = vmatpush1.bf16.xpose.msra.mxu0 0
        %588 = vmatprep.subr.bf16.mxu0 0
        %589 = vmatpush1.bf16.xpose.msra.mxu0 0
        %590 = vmatprep.subr.bf16.mxu0 0
        %591 = vmatpush1.bf16.xpose.msra.mxu0 0
        %592 = vmatprep.subr.bf16.mxu0 0
        %593 = vmatpush1.bf16.xpose.msra.mxu0 0
        %594 = vmatprep.subr.bf16.mxu0 0
        %595 = vmatpush1.bf16.xpose.msra.mxu0 0
        %596 = vmatprep.subr.bf16.mxu0 0
        %597 = vmatpush1.bf16.xpose.msra.mxu0 0
        %598 = vmatprep.subr.bf16.mxu0 0
        %599 = vmatpush1.bf16.xpose.msra.mxu0 0
        %600 = vmatprep.subr.bf16.mxu0 0
        %601 = vmatpush1.bf16.xpose.msra.mxu0 0
        %602 = vmatprep.subr.bf16.mxu0 0
        %603 = vmatpush1.bf16.xpose.msra.mxu0 0
        %604 = vmatprep.mubr.bf16.mxu0 0
        %605 = vmatmul.mubr.bf16.gmra.mrb[0].mxu0 %v567
        %v606 = vpop.f32.mrb[0].mxu0
        %v607 = vadd.f32 0.0, %v606
        %v608 = vpop.f32.mrb[0].mxu0
        %v609 = vpop.f32.mrb[0].mxu0
        %v610 = vpop.f32.mrb[0].mxu0
        %611 = vdwg.mxu0
        %v612 = vsel %vm502, %v607, -inf
        %613 = vmax.xlane.f32.xlu0 %v612
        %v614 = vpop.xlane.xlu0 %613
        %v615 = vsub.f32 %v607, %v614
        %v616 = vmul.f32 %v615, 1.442695
        %v617 = vpow.pop %v616
        %v618 = vsel %vm502, %v617, 0.0
        %619 = vadd.xlane.f32.xlu0 %v618
        %v620 = vpop.xlane.xlu0 %619
        %v621 = vrcp.pop %v620
        %v622 = vmul.f32 %v617, %v621
        %v623 = vpack.c.bf16 %v622, %v622
        %625 = vrot.lane.b32.xlu0 %v451, 112
        %v626 = vpop.permute.xlu0 %625
        %v628 = vsel %vm502, %v623, 0
        %v631 = vsel %vm518, %v626, 0
        %633 = vmatprep.subr.bf16.mxu0 0
        %634 = vmatpush1.bf16.msra.mxu0 %v631
        %635 = vmatprep.subr.bf16.mxu0 0
        %636 = vmatpush1.bf16.msra.mxu0 0
        %637 = vmatprep.subr.bf16.mxu0 0
        %638 = vmatpush1.bf16.msra.mxu0 0
        %639 = vmatprep.subr.bf16.mxu0 0
        %640 = vmatpush1.bf16.msra.mxu0 0
        %641 = vmatprep.subr.bf16.mxu0 0
        %642 = vmatpush1.bf16.msra.mxu0 0
        %643 = vmatprep.subr.bf16.mxu0 0
        %644 = vmatpush1.bf16.msra.mxu0 0
        %645 = vmatprep.subr.bf16.mxu0 0
        %646 = vmatpush1.bf16.msra.mxu0 0
        %647 = vmatprep.subr.bf16.mxu0 0
        %648 = vmatpush1.bf16.msra.mxu0 0
        %649 = vmatprep.subr.bf16.mxu0 0
        %650 = vmatpush1.bf16.msra.mxu0 0
        %651 = vmatprep.subr.bf16.mxu0 0
        %652 = vmatpush1.bf16.msra.mxu0 0
        %653 = vmatprep.subr.bf16.mxu0 0
        %654 = vmatpush1.bf16.msra.mxu0 0
        %655 = vmatprep.subr.bf16.mxu0 0
        %656 = vmatpush1.bf16.msra.mxu0 0
        %657 = vmatprep.subr.bf16.mxu0 0
        %658 = vmatpush1.bf16.msra.mxu0 0
        %659 = vmatprep.subr.bf16.mxu0 0
        %660 = vmatpush1.bf16.msra.mxu0 0
        %661 = vmatprep.subr.bf16.mxu0 0
        %662 = vmatpush1.bf16.msra.mxu0 0
        %663 = vmatprep.subr.bf16.mxu0 0
        %664 = vmatpush1.bf16.msra.mxu0 0
        %665 = vmatprep.mubr.bf16.mxu0 0
        %666 = vmatmul.mubr.bf16.gmra.mrb[0].mxu0 %v628
        %v667 = vpop.f32.mrb[0].mxu0
        %v668 = vadd.f32 0.0, %v667
        %v669 = vpop.f32.mrb[0].mxu0
        %v670 = vpop.f32.mrb[0].mxu0
        %v671 = vpop.f32.mrb[0].mxu0
        %672 = vdwg.mxu0
        %673 = vrot.lane.b32.xlu0 %v450, 96
        %v674 = vpop.permute.xlu0 %673
        %675 = vrot.lane.b32.xlu0 %v450, 32
        %v676 = vpop.permute.xlu0 %675
        %v678 = vsel %vm455, %v674, 0
        %v681 = vsel %vm455, %v676, 0
        %683 = vmatprep.subr.bf16.mxu0 0
        %684 = vmatpush1.bf16.xpose.msra.mxu0 %v681
        %685 = vmatprep.subr.bf16.mxu0 0
        %686 = vmatpush1.bf16.xpose.msra.mxu0 0
        %687 = vmatprep.subr.bf16.mxu0 0
        %688 = vmatpush1.bf16.xpose.msra.mxu0 0
        %689 = vmatprep.subr.bf16.mxu0 0
        %690 = vmatpush1.bf16.xpose.msra.mxu0 0
        %691 = vmatprep.subr.bf16.mxu0 0
        %692 = vmatpush1.bf16.xpose.msra.mxu0 0
        %693 = vmatprep.subr.bf16.mxu0 0
        %694 = vmatpush1.bf16.xpose.msra.mxu0 0
        %695 = vmatprep.subr.bf16.mxu0 0
        %696 = vmatpush1.bf16.xpose.msra.mxu0 0
        %697 = vmatprep.subr.bf16.mxu0 0
        %698 = vmatpush1.bf16.xpose.msra.mxu0 0
        %699 = vmatprep.subr.bf16.mxu0 0
        %700 = vmatpush1.bf16.xpose.msra.mxu0 0
        %701 = vmatprep.subr.bf16.mxu0 0
        %702 = vmatpush1.bf16.xpose.msra.mxu0 0
        %703 = vmatprep.subr.bf16.mxu0 0
        %704 = vmatpush1.bf16.xpose.msra.mxu0 0
        %705 = vmatprep.subr.bf16.mxu0 0
        %706 = vmatpush1.bf16.xpose.msra.mxu0 0
        %707 = vmatprep.subr.bf16.mxu0 0
        %708 = vmatpush1.bf16.xpose.msra.mxu0 0
        %709 = vmatprep.subr.bf16.mxu0 0
        %710 = vmatpush1.bf16.xpose.msra.mxu0 0
        %711 = vmatprep.subr.bf16.mxu0 0
        %712 = vmatpush1.bf16.xpose.msra.mxu0 0
        %713 = vmatprep.subr.bf16.mxu0 0
        %714 = vmatpush1.bf16.xpose.msra.mxu0 0
        %715 = vmatprep.mubr.bf16.mxu0 0
        %716 = vmatmul.mubr.bf16.gmra.mrb[0].mxu0 %v678
        %v717 = vpop.f32.mrb[0].mxu0
        %v718 = vadd.f32 0.0, %v717
        %v719 = vpop.f32.mrb[0].mxu0
        %v720 = vpop.f32.mrb[0].mxu0
        %v721 = vpop.f32.mrb[0].mxu0
        %722 = vdwg.mxu0
        %v723 = vsel %vm502, %v718, -inf
        %724 = vmax.xlane.f32.xlu0 %v723
        %v725 = vpop.xlane.xlu0 %724
        %v726 = vsub.f32 %v718, %v725
        %v727 = vmul.f32 %v726, 1.442695
        %v728 = vpow.pop %v727
        %v729 = vsel %vm502, %v728, 0.0
        %730 = vadd.xlane.f32.xlu0 %v729
        %v731 = vpop.xlane.xlu0 %730
        %v732 = vrcp.pop %v731
        %v733 = vmul.f32 %v728, %v732
        %v734 = vpack.c.bf16 %v733, %v733
        %735 = vrot.lane.b32.xlu0 %v451, 96
        %v736 = vpop.permute.xlu0 %735
        %v738 = vsel %vm502, %v734, 0
        %v741 = vsel %vm518, %v736, 0
        %743 = vmatprep.subr.bf16.mxu0 0
        %744 = vmatpush1.bf16.msra.mxu0 %v741
        %745 = vmatprep.subr.bf16.mxu0 0
        %746 = vmatpush1.bf16.msra.mxu0 0
        %747 = vmatprep.subr.bf16.mxu0 0
        %748 = vmatpush1.bf16.msra.mxu0 0
        %749 = vmatprep.subr.bf16.mxu0 0
        %750 = vmatpush1.bf16.msra.mxu0 0
        %751 = vmatprep.subr.bf16.mxu0 0
        %752 = vmatpush1.bf16.msra.mxu0 0
        %753 = vmatprep.subr.bf16.mxu0 0
        %754 = vmatpush1.bf16.msra.mxu0 0
        %755 = vmatprep.subr.bf16.mxu0 0
        %756 = vmatpush1.bf16.msra.mxu0 0
        %757 = vmatprep.subr.bf16.mxu0 0
        %758 = vmatpush1.bf16.msra.mxu0 0
        %759 = vmatprep.subr.bf16.mxu0 0
        %760 = vmatpush1.bf16.msra.mxu0 0
        %761 = vmatprep.subr.bf16.mxu0 0
        %762 = vmatpush1.bf16.msra.mxu0 0
        %763 = vmatprep.subr.bf16.mxu0 0
        %764 = vmatpush1.bf16.msra.mxu0 0
        %765 = vmatprep.subr.bf16.mxu0 0
        %766 = vmatpush1.bf16.msra.mxu0 0
        %767 = vmatprep.subr.bf16.mxu0 0
        %768 = vmatpush1.bf16.msra.mxu0 0
        %769 = vmatprep.subr.bf16.mxu0 0
        %770 = vmatpush1.bf16.msra.mxu0 0
        %771 = vmatprep.subr.bf16.mxu0 0
        %772 = vmatpush1.bf16.msra.mxu0 0
        %773 = vmatprep.subr.bf16.mxu0 0
        %774 = vmatpush1.bf16.msra.mxu0 0
        %775 = vmatprep.mubr.bf16.mxu0 0
        %776 = vmatmul.mubr.bf16.gmra.mrb[0].mxu0 %v738
        %v777 = vpop.f32.mrb[0].mxu0
        %v778 = vadd.f32 0.0, %v777
        %v779 = vpop.f32.mrb[0].mxu0
        %v780 = vpop.f32.mrb[0].mxu0
        %v781 = vpop.f32.mrb[0].mxu0
        %782 = vdwg.mxu0
        %783 = vrot.lane.b32.xlu0 %v450, 80
        %v784 = vpop.permute.xlu0 %783
        %785 = vrot.lane.b32.xlu0 %v450, 16
        %v786 = vpop.permute.xlu0 %785
        %v788 = vsel %vm455, %v784, 0
        %v791 = vsel %vm455, %v786, 0
        %793 = vmatprep.subr.bf16.mxu0 0
        %794 = vmatpush1.bf16.xpose.msra.mxu0 %v791
        %795 = vmatprep.subr.bf16.mxu0 0
        %796 = vmatpush1.bf16.xpose.msra.mxu0 0
        %797 = vmatprep.subr.bf16.mxu0 0
        %798 = vmatpush1.bf16.xpose.msra.mxu0 0
        %799 = vmatprep.subr.bf16.mxu0 0
        %800 = vmatpush1.bf16.xpose.msra.mxu0 0
        %801 = vmatprep.subr.bf16.mxu0 0
        %802 = vmatpush1.bf16.xpose.msra.mxu0 0
        %803 = vmatprep.subr.bf16.mxu0 0
        %804 = vmatpush1.bf16.xpose.msra.mxu0 0
        %805 = vmatprep.subr.bf16.mxu0 0
        %806 = vmatpush1.bf16.xpose.msra.mxu0 0
        %807 = vmatprep.subr.bf16.mxu0 0
        %808 = vmatpush1.bf16.xpose.msra.mxu0 0
        %809 = vmatprep.subr.bf16.mxu0 0
        %810 = vmatpush1.bf16.xpose.msra.mxu0 0
        %811 = vmatprep.subr.bf16.mxu0 0
        %812 = vmatpush1.bf16.xpose.msra.mxu0 0
        %813 = vmatprep.subr.bf16.mxu0 0
        %814 = vmatpush1.bf16.xpose.msra.mxu0 0
        %815 = vmatprep.subr.bf16.mxu0 0
        %816 = vmatpush1.bf16.xpose.msra.mxu0 0
        %817 = vmatprep.subr.bf16.mxu0 0
        %818 = vmatpush1.bf16.xpose.msra.mxu0 0
        %819 = vmatprep.subr.bf16.mxu0 0
        %820 = vmatpush1.bf16.xpose.msra.mxu0 0
        %821 = vmatprep.subr.bf16.mxu0 0
        %822 = vmatpush1.bf16.xpose.msra.mxu0 0
        %823 = vmatprep.subr.bf16.mxu0 0
        %824 = vmatpush1.bf16.xpose.msra.mxu0 0
        %825 = vmatprep.mubr.bf16.mxu0 0
        %826 = vmatmul.mubr.bf16.gmra.mrb[0].mxu0 %v788
        %v827 = vpop.f32.mrb[0].mxu0
        %v828 = vadd.f32 0.0, %v827
        %v829 = vpop.f32.mrb[0].mxu0
        %v830 = vpop.f32.mrb[0].mxu0
        %v831 = vpop.f32.mrb[0].mxu0
        %832 = vdwg.mxu0
        %v833 = vsel %vm502, %v828, -inf
        %834 = vmax.xlane.f32.xlu0 %v833
        %v835 = vpop.xlane.xlu0 %834
        %v836 = vsub.f32 %v828, %v835
        %v837 = vmul.f32 %v836, 1.442695
        %v838 = vpow.pop %v837
        %v839 = vsel %vm502, %v838, 0.0
        %840 = vadd.xlane.f32.xlu0 %v839
        %v841 = vpop.xlane.xlu0 %840
        %v842 = vrcp.pop %v841
        %v843 = vmul.f32 %v838, %v842
        %v844 = vpack.c.bf16 %v843, %v843
        %845 = vrot.lane.b32.xlu0 %v451, 80
        %v846 = vpop.permute.xlu0 %845
        %v848 = vsel %vm502, %v844, 0
        %v851 = vsel %vm518, %v846, 0
        %853 = vmatprep.subr.bf16.mxu0 0
        %854 = vmatpush1.bf16.msra.mxu0 %v851
        %855 = vmatprep.subr.bf16.mxu0 0
        %856 = vmatpush1.bf16.msra.mxu0 0
        %857 = vmatprep.subr.bf16.mxu0 0
        %858 = vmatpush1.bf16.msra.mxu0 0
        %859 = vmatprep.subr.bf16.mxu0 0
        %860 = vmatpush1.bf16.msra.mxu0 0
        %861 = vmatprep.subr.bf16.mxu0 0
        %862 = vmatpush1.bf16.msra.mxu0 0
        %863 = vmatprep.subr.bf16.mxu0 0
        %864 = vmatpush1.bf16.msra.mxu0 0
        %865 = vmatprep.subr.bf16.mxu0 0
        %866 = vmatpush1.bf16.msra.mxu0 0
        %867 = vmatprep.subr.bf16.mxu0 0
        %868 = vmatpush1.bf16.msra.mxu0 0
        %869 = vmatprep.subr.bf16.mxu0 0
        %870 = vmatpush1.bf16.msra.mxu0 0
        %871 = vmatprep.subr.bf16.mxu0 0
        %872 = vmatpush1.bf16.msra.mxu0 0
        %873 = vmatprep.subr.bf16.mxu0 0
        %874 = vmatpush1.bf16.msra.mxu0 0
        %875 = vmatprep.subr.bf16.mxu0 0
        %876 = vmatpush1.bf16.msra.mxu0 0
        %877 = vmatprep.subr.bf16.mxu0 0
        %878 = vmatpush1.bf16.msra.mxu0 0
        %879 = vmatprep.subr.bf16.mxu0 0
        %880 = vmatpush1.bf16.msra.mxu0 0
        %881 = vmatprep.subr.bf16.mxu0 0
        %882 = vmatpush1.bf16.msra.mxu0 0
        %883 = vmatprep.subr.bf16.mxu0 0
        %884 = vmatpush1.bf16.msra.mxu0 0
        %885 = vmatprep.mubr.bf16.mxu0 0
        %886 = vmatmul.mubr.bf16.gmra.mrb[0].mxu0 %v848
        %v887 = vpop.f32.mrb[0].mxu0
        %v888 = vadd.f32 0.0, %v887
        %v889 = vpop.f32.mrb[0].mxu0
        %v890 = vpop.f32.mrb[0].mxu0
        %v891 = vpop.f32.mrb[0].mxu0
        %892 = vdwg.mxu0
        %894 = vrot.lane.b32.xlu0 %v668, 16
        %v895 = vpop.permute.xlu0 %894
        %898 = vrot.lane.b32.xlu0 %v778, 32
        %v899 = vpop.permute.xlu0 %898
        %902 = vrot.lane.b32.xlu0 %v888, 48
        %v903 = vpop.permute.xlu0 %902
        %v905 = vsel %vm455, %v557, %v895
        %v906 = vsel %vm350, %v905, %v899
        %vm907 = vcmask 392192
        %v908 = vsel %vm907, %v906, %v903
        %v909 = vpack.c.bf16 %v908, %v908
        %v910 = vld [vmem:[%s337] sm:$0xf]
        %v911 = vld [vmem:[%s337 + $0x4] sm:$0xf]
        %v912 = vld [vmem:[%s337 + $0x8] sm:$0xf]
        %v913 = vld [vmem:[%s337 + $0xc] sm:$0xf]
        %v914 = vld [vmem:[%s337 + $0x10] sm:$0xf]
        %v915 = vld [vmem:[%s337 + $0x14] sm:$0xf]
        %v916 = vld [vmem:[%s337 + $0x18] sm:$0xf]
        %v917 = vld [vmem:[%s337 + $0x1c] sm:$0xf]
        %v918 = vld [vmem:[%s340] sm:$0x1]
        %v920 = vlaneseq
        %v921 = vshrl.u32 %v920, 7
        %v922 = vsub.s32 0, %v921
        %v923 = vrot.slane %v918, %v922
        %v933 = vunpack.c.l.b16 %v910
        %v934 = vunpack.c.l.b16 %v911
        %v935 = vunpack.c.l.b16 %v912
        %v936 = vunpack.c.l.b16 %v913
        %v937 = vunpack.c.l.b16 %v914
        %v938 = vunpack.c.l.b16 %v915
        %v939 = vunpack.c.l.b16 %v916
        %v940 = vunpack.c.l.b16 %v917
        %v941 = vpack.c.b16 %v934, %v933
        %v942 = vpack.c.b16 %v936, %v935
        %v943 = vpack.c.b16 %v938, %v937
        %v944 = vpack.c.b16 %v940, %v939
        %vm949 = vcmask 523264
        %v951 = vsel %vm949, %v909, 0
        %953 = vmatprep.subr.bf16.mxu0 0
        %954 = vmatpush1.bf16.msra.mxu0 %v941
        %955 = vmatprep.subr.bf16.mxu0 0
        %956 = vmatpush1.bf16.msra.mxu0 %v942
        %957 = vmatprep.subr.bf16.mxu0 0
        %958 = vmatpush1.bf16.msra.mxu0 %v943
        %959 = vmatprep.subr.bf16.mxu0 0
        %960 = vmatpush1.bf16.msra.mxu0 %v944
        %961 = vmatprep.subr.bf16.mxu0 0
        %962 = vmatpush1.bf16.msra.mxu0 0
        %963 = vmatprep.subr.bf16.mxu0 0
        %964 = vmatpush1.bf16.msra.mxu0 0
        %965 = vmatprep.subr.bf16.mxu0 0
        %966 = vmatpush1.bf16.msra.mxu0 0
        %967 = vmatprep.subr.bf16.mxu0 0
        %968 = vmatpush1.bf16.msra.mxu0 0
        %969 = vmatprep.subr.bf16.mxu0 0
        %970 = vmatpush1.bf16.msra.mxu0 0
        %971 = vmatprep.subr.bf16.mxu0 0
        %972 = vmatpush1.bf16.msra.mxu0 0
        %973 = vmatprep.subr.bf16.mxu0 0
        %974 = vmatpush1.bf16.msra.mxu0 0
        %975 = vmatprep.subr.bf16.mxu0 0
        %976 = vmatpush1.bf16.msra.mxu0 0
        %977 = vmatprep.subr.bf16.mxu0 0
        %978 = vmatpush1.bf16.msra.mxu0 0
        %979 = vmatprep.subr.bf16.mxu0 0
        %980 = vmatpush1.bf16.msra.mxu0 0
        %981 = vmatprep.subr.bf16.mxu0 0
        %982 = vmatpush1.bf16.msra.mxu0 0
        %983 = vmatprep.subr.bf16.mxu0 0
        %984 = vmatpush1.bf16.msra.mxu0 0
        %985 = vmatprep.mubr.bf16.mxu0 0
        %986 = vmatmul.mubr.bf16.gmra.mrb[0].mxu0 %v951
        %v987 = vpop.f32.mrb[0].mxu0
        %v988 = vadd.f32 %v923, %v987
        %v989 = vpop.f32.mrb[0].mxu0
        %v990 = vpop.f32.mrb[0].mxu0
        %v991 = vpop.f32.mrb[0].mxu0
        %992 = vdwg.mxu0
        %v993 = vadd.f32 %v988, %v349
        %994 = vst.msk [vmem:[#allocation2] sm:$0xff] %vm350, %v993
        %p995 = scmp.eq.s32.totalorder %s25, 1
        // Predicated region
        $region49: #{tpu_custom_call.1} parent=43 // pred_check
          %p996 = pneg %p995
        $region50: #{tpu_custom_call.1} parent=43 // pred_check_branch
          %998 = sbr.rel (%p996) target = $region52
        $region51: #{tpu_custom_call.1} parent=43 // pred_region
          %999 = vst.msk [vmem:[%s317] sm:$0xff] %vm350, %v993
        $region52: #{tpu_custom_call.1} parent=43 // pred_fallthru
          _
        %s1000 = sand.u32 %s196, 1
        %s1001 = scalar_lea.sflag [#allocation4], %s1000
        %s1002 = sand.u32 %s196, 1
        %s1003 = smul.addr %s1002, 8
        %s1004 = scalar_lea.vmem [#allocation3], %s1003
        // Predicated region
        $region53: #{tpu_custom_call.1} parent=43 // pred_check
          %p1005 = pneg %p206
        $region54: #{tpu_custom_call.1} parent=43 // pred_check_branch
          %1007 = sbr.rel (%p1005) target = $region56
        $region55: #{tpu_custom_call.1} parent=43 // pred_region
          %s1009 = ssub.s32 128, 128
          %1010 = vsyncadd %s1001, %s1009
          %s1011 = smul.addr %s24, 128
          %s1012 = scalar_lea.hbm %s6, %s1011
          %s1014 = sshll.u32 %s1004, 4
          %s1015 = int_to_ptr.vmem [resolvable:$true] %s1014
          %1017 = dma.vmem_to_hbm [thread:$0]  %s1015, 128, %s1012, %s1001
        $region56: #{tpu_custom_call.1} parent=43 // pred_fallthru
          _
      $region44: #{tpu_custom_call.1} parent=5 // pred_fallthru
        _
      %p1018 = scmp.le.s32.totalorder 2, %s15
      // Predicated region
      $region57: #{tpu_custom_call.1} parent=5 // pred_check
        %p1019 = pneg %p1018
      $region58: #{tpu_custom_call.1} parent=5 // pred_check_branch
        %1021 = sbr.rel (%p1019) target = $region60
      $region59: #{tpu_custom_call.1} parent=5 // pred_region
        %s1022 = ssub.s32 %s15, 2
        // Predicated region
        $region61: #{tpu_custom_call.1} parent=59 // pred_check
          %p1023 = pneg %p212
        $region62: #{tpu_custom_call.1} parent=59 // pred_check_branch
          %1025 = sbr.rel (%p1023) target = $region64
        $region63: #{tpu_custom_call.1} parent=59 // pred_region
          %s1026 = sand.u32 %s197, 1
          %s1027 = scalar_lea.sflag [#allocation4], %s1026
          %s1028 = sand.u32 %s197, 1
          %s1029 = smul.addr %s1028, 8
          %s1030 = scalar_lea.vmem [#allocation3], %s1029
          %1031 = dma.done %s1027, 128
        $region64: #{tpu_custom_call.1} parent=59 // pred_fallthru
          _
      $region60: #{tpu_custom_call.1} parent=5 // pred_fallthru
        _
    $region6: #{tpu_custom_call.1} parent=1 // loop_footer
      %s19 = sadd.s32 1, %s15
    $region7: #{tpu_custom_call.1} parent=1 // loop_footer_branch
      %14 = sbr.rel target = $region3
    $region8: #{tpu_custom_call.1} parent=1 // loop_exit
      _
    %1032 = vsyncpa [#allocation4], 1
    %s1033 = scalar_lea.sflag [#allocation4], 1
    %1034 = vsyncpa %s1033, 1

</llo_original>
